<compile_context>
chip_gen: v7x
topology: tpu7x:2x2x1
jax: 0.10.0
libtpu: 0.0.40
codegen_flags: <defaults>
</compile_context>

<pallas_src>
import functools

import jax
import jax.numpy as jnp
from jax.experimental import pallas as pl
from jax.experimental.pallas import tpu as pltpu


def _attn_bias_inner_kernel(sp_ref, et_ref, table_ref, o_ref, *, v_spatial):
    """spatial_pos embedding + mean edge embedding for one row tile of one graph.

    sp_ref    : [1, TI, N]          int32   spatial_pos tile
    et_ref    : [1, TI, N, Fe]      int32   attn_edge_type tile
    table_ref : [V_sp + V_edge, H]  f32     fused table (edge rows pre-scaled 1/Fe)
    o_ref     : [1, TI, N, H]       f32
    """
    ti, n = sp_ref.shape[1], sp_ref.shape[2]
    fe = et_ref.shape[3]
    v_tot, h = table_ref.shape
    rows = ti * n

    # One column-iota shared by all one-hot compares.  Kept at rank 3 with the
    # vocab in the lane (last) dim -- no extra Fe factor in the live tile.
    col = jax.lax.broadcasted_iota(jnp.int32, (ti, n, v_tot), 2)

    # Spatial one-hot occupies columns [0, V_sp).
    onehot = (sp_ref[0][:, :, None] == col).astype(jnp.float32)

    # Edge counts occupy columns [V_sp, V_sp + V_edge): one 2-D compare per edge
    # feature (Fe is tiny and static -> unrolled), VPU-only, no XLU reduction.
    et = et_ref[0] + v_spatial
    for f in range(fe):
        onehot = onehot + (et[:, :, f:f + 1] == col).astype(jnp.float32)

    # Single fused MXU matmul: [TI*N, V_tot] @ [V_tot, H].
    bias = jnp.dot(onehot.reshape(rows, v_tot), table_ref[...],
                   preferred_element_type=jnp.float32)
    o_ref[0] = bias.reshape(ti, n, h)


def _pick_row_tile(n_node, v_tot, budget_bytes=8 * 1024 * 1024):
    """Largest row tile TI (divisor of N, multiple of 8 or == N) whose
    [TI*N, V_tot] f32 one-hot stays under a per-step VMEM budget."""
    ti = n_node
    while ti > 8 and ti % 2 == 0 and ti * n_node * v_tot * 4 > budget_bytes:
        ti //= 2
    if ti != n_node and ti % 8 != 0:
        ti = n_node  # full-extent block is always a legal block shape
    return ti


@jax.jit
def graph_attn_bias(attn_bias, spatial_pos, attn_edge_type,
                    edge_w, spatial_w, graph_token_dist_w):
    n_graph, np1, _ = attn_bias.shape
    n_node = spatial_pos.shape[1]
    n_edge_feat = attn_edge_type.shape[-1]
    num_heads = edge_w.shape[1]
    v_spatial = spatial_w.shape[0]
    v_edge = edge_w.shape[0]
    v_tot = v_spatial + v_edge

    # Fused gather table; pre-scaling the edge rows by 1/Fe turns the
    # edge_encoder(...).mean(-2) of the reference into a plain count matmul.
    fused_table = jnp.concatenate(
        [spatial_w, edge_w * (1.0 / n_edge_feat)], axis=0).astype(jnp.float32)

    ti = _pick_row_tile(n_node, v_tot)
    grid = (n_graph, n_node // ti)

    inner = pl.pallas_call(
        functools.partial(_attn_bias_inner_kernel, v_spatial=v_spatial),
        out_shape=jax.ShapeDtypeStruct(
            (n_graph, n_node, n_node, num_heads), jnp.float32),
        grid_spec=pltpu.PrefetchScalarGridSpec(
            num_scalar_prefetch=0,
            grid=grid,
            in_specs=[
                pl.BlockSpec((1, ti, n_node), lambda g, i: (g, i, 0)),
                pl.BlockSpec((1, ti, n_node, n_edge_feat),
                             lambda g, i: (g, i, 0, 0)),
                pl.BlockSpec((v_tot, num_heads), lambda g, i: (0, 0)),
            ],
            out_specs=pl.BlockSpec((1, ti, n_node, num_heads),
                                   lambda g, i: (g, i, 0, 0)),
        ),
        compiler_params=pltpu.CompilerParams(
            dimension_semantics=("parallel", "parallel")),
    )(spatial_pos.astype(jnp.int32), attn_edge_type.astype(jnp.int32),
      fused_table)

    # Cheap, memory-bound frame assembly in XLA.  Torch semantics:
    #   out = 2*attn_bias (broadcast over heads)
    #   out[:, :, 1:, 1:] += spatial_bias + edge_bias   (the kernel result)
    #   out[:, :, 1:, 0]  += t ;  out[:, :, 0, :] += t
    inner = jnp.transpose(inner, (0, 3, 1, 2))                     # [B, H, N, N]
    t = graph_token_dist_w.reshape(1, num_heads, 1)
    out = jnp.broadcast_to(2.0 * attn_bias[:, None, :, :],
                           (n_graph, num_heads, np1, np1))
    out = out.at[:, :, 1:, 1:].add(inner)
    out = out.at[:, :, 1:, 0].add(t)
    out = out.at[:, :, 0, :].add(t)
    return out


def _reference(attn_bias, spatial_pos, attn_edge_type,
               edge_w, spatial_w, graph_token_dist_w):
    n_graph, np1, _ = attn_bias.shape
    num_heads = edge_w.shape[1]
    g = jnp.broadcast_to(attn_bias[:, None, :, :],
                         (n_graph, num_heads, np1, np1))
    sp_bias = jnp.transpose(jnp.take(spatial_w, spatial_pos, axis=0),
                            (0, 3, 1, 2))
    g = g.at[:, :, 1:, 1:].add(sp_bias)
    t = graph_token_dist_w.reshape(1, num_heads, 1)
    g = g.at[:, :, 1:, 0].add(t)
    g = g.at[:, :, 0, :].add(t)
    edge_bias = jnp.take(edge_w, attn_edge_type, axis=0).mean(axis=-2)
    g = g.at[:, :, 1:, 1:].add(jnp.transpose(edge_bias, (0, 3, 1, 2)))
    g = g + attn_bias[:, None, :, :]
    return g


if __name__ == "__main__":
    # Module hyper-params (small, forward-consistent with GraphAttnBias).
    num_heads = 8
    num_edges = 32
    num_spatial = 16
    num_edge_dis = 8          # only used by the multi_hop branch (not implemented)
    hidden_dim = 32           # unused in this forward path
    multi_hop_max_dist = 5    # unused (edge_type != 'multi_hop')

    n_graph, n_node, n_edge_feat = 2, 8, 4

    key = jax.random.PRNGKey(0)
    k_ew, k_sw, k_tw, k_ab, k_sp, k_et = jax.random.split(key, 6)

    # nn.Embedding ~ N(0,1); padding_idx=0 rows zeroed.
    edge_w = jax.random.normal(k_ew, (num_edges, num_heads), jnp.float32)
    edge_w = edge_w.at[0].set(0.0)
    spatial_w = jax.random.normal(k_sw, (num_spatial, num_heads), jnp.float32)
    spatial_w = spatial_w.at[0].set(0.0)
    graph_token_dist_w = jax.random.normal(k_tw, (1, num_heads), jnp.float32)

    # Deterministic example inputs (indices kept in range; note: out-of-range
    # indices would clamp in jnp.take but give a zero row in the one-hot path).
    attn_bias = jax.random.normal(k_ab, (n_graph, n_node + 1, n_node + 1),
                                  jnp.float32)
    spatial_pos = jax.random.randint(k_sp, (n_graph, n_node, n_node),
                                     0, num_spatial, jnp.int32)
    attn_edge_type = jax.random.randint(
        k_et, (n_graph, n_node, n_node, n_edge_feat), 0, num_edges, jnp.int32)

    out = graph_attn_bias(attn_bias, spatial_pos, attn_edge_type,
                          edge_w, spatial_w, graph_token_dist_w)
    out = jax.block_until_ready(out)

    ref = _reference(attn_bias, spatial_pos, attn_edge_type,
                     edge_w, spatial_w, graph_token_dist_w)
    assert out.shape == (n_graph, num_heads, n_node + 1, n_node + 1)
    assert jnp.allclose(out, ref, atol=1e-4, rtol=1e-4), \
        float(jnp.max(jnp.abs(out - ref)))

    print("KERNEL_OK")
</pallas_src>

<mosaic_0001>
module attributes {stable_mosaic.version = 11 : i64} {
  func.func @_attn_bias_inner_kernel(%arg0: i32, %arg1: i32, %arg2: memref<1x8x8xi32, #tpu.memory_space<vmem>>, %arg3: memref<1x8x8x4xi32, #tpu.memory_space<vmem>>, %arg4: memref<48x8xf32, #tpu.memory_space<vmem>>, %arg5: memref<1x8x8x8xf32, #tpu.memory_space<vmem>>) attributes {dimension_semantics = [#tpu.dimension_semantics<parallel>, #tpu.dimension_semantics<parallel>], iteration_bounds = array<i64: 2, 1>, scalar_prefetch = 0 : i64, scratch_operands = 0 : i64, tpu.core_type = #tpu.core_type<tc>, window_params = [{transform_indices = @transform_0, window_bounds = array<i64: 1, 8, 8>}, {transform_indices = @transform_1, window_bounds = array<i64: 1, 8, 8, 4>}, {pipeline_mode = #tpu.pipeline_mode<synchronous>, transform_indices = @transform_2, window_bounds = array<i64: 48, 8>}, {transform_indices = @transform_3, window_bounds = array<i64: 1, 8, 8, 8>}]} {
    %0 = tpu.iota {dimensions = array<i32: 2>} : vector<8x8x48xi32>
    %c0 = arith.constant 0 : index
    %c0_0 = arith.constant 0 : index
    %c0_1 = arith.constant 0 : index
    %1 = vector.load %arg2[%c0, %c0_0, %c0_1] : memref<1x8x8xi32, #tpu.memory_space<vmem>>, vector<1x8x8xi32>
    %2 = vector.shape_cast %1 : vector<1x8x8xi32> to vector<8x8xi32>
    %3 = vector.shape_cast %2 : vector<8x8xi32> to vector<8x8x1xi32>
    %4 = vector.broadcast %3 : vector<8x8x1xi32> to vector<8x8x48xi32>
    %5 = arith.cmpi eq, %4, %0 : vector<8x8x48xi32>
    %6 = arith.extui %5 : vector<8x8x48xi1> to vector<8x8x48xi32>
    %7 = arith.sitofp %6 : vector<8x8x48xi32> to vector<8x8x48xf32>
    %c0_2 = arith.constant 0 : index
    %c0_3 = arith.constant 0 : index
    %c0_4 = arith.constant 0 : index
    %c0_5 = arith.constant 0 : index
    %8 = vector.load %arg3[%c0_2, %c0_3, %c0_4, %c0_5] : memref<1x8x8x4xi32, #tpu.memory_space<vmem>>, vector<1x8x8x4xi32>
    %9 = vector.shape_cast %8 : vector<1x8x8x4xi32> to vector<8x8x4xi32>
    %c16_i32 = arith.constant 16 : i32
    %10 = vector.broadcast %c16_i32 : i32 to vector<8x8x4xi32>
    %11 = arith.addi %9, %10 : vector<8x8x4xi32>
    %12 = vector.extract_strided_slice %11 {offsets = [0, 0, 0], sizes = [8, 8, 1], strides = [1, 1, 1]} : vector<8x8x4xi32> to vector<8x8x1xi32>
    %13 = vector.broadcast %12 : vector<8x8x1xi32> to vector<8x8x48xi32>
    %14 = arith.cmpi eq, %13, %0 : vector<8x8x48xi32>
    %15 = arith.extui %14 : vector<8x8x48xi1> to vector<8x8x48xi32>
    %16 = arith.sitofp %15 : vector<8x8x48xi32> to vector<8x8x48xf32>
    %17 = arith.addf %7, %16 : vector<8x8x48xf32>
    %18 = vector.extract_strided_slice %11 {offsets = [0, 0, 1], sizes = [8, 8, 1], strides = [1, 1, 1]} : vector<8x8x4xi32> to vector<8x8x1xi32>
    %19 = vector.broadcast %18 : vector<8x8x1xi32> to vector<8x8x48xi32>
    %20 = arith.cmpi eq, %19, %0 : vector<8x8x48xi32>
    %21 = arith.extui %20 : vector<8x8x48xi1> to vector<8x8x48xi32>
    %22 = arith.sitofp %21 : vector<8x8x48xi32> to vector<8x8x48xf32>
    %23 = arith.addf %17, %22 : vector<8x8x48xf32>
    %24 = vector.extract_strided_slice %11 {offsets = [0, 0, 2], sizes = [8, 8, 1], strides = [1, 1, 1]} : vector<8x8x4xi32> to vector<8x8x1xi32>
    %25 = vector.broadcast %24 : vector<8x8x1xi32> to vector<8x8x48xi32>
    %26 = arith.cmpi eq, %25, %0 : vector<8x8x48xi32>
    %27 = arith.extui %26 : vector<8x8x48xi1> to vector<8x8x48xi32>
    %28 = arith.sitofp %27 : vector<8x8x48xi32> to vector<8x8x48xf32>
    %29 = arith.addf %23, %28 : vector<8x8x48xf32>
    %30 = vector.extract_strided_slice %11 {offsets = [0, 0, 3], sizes = [8, 8, 1], strides = [1, 1, 1]} : vector<8x8x4xi32> to vector<8x8x1xi32>
    %31 = vector.broadcast %30 : vector<8x8x1xi32> to vector<8x8x48xi32>
    %32 = arith.cmpi eq, %31, %0 : vector<8x8x48xi32>
    %33 = arith.extui %32 : vector<8x8x48xi1> to vector<8x8x48xi32>
    %34 = arith.sitofp %33 : vector<8x8x48xi32> to vector<8x8x48xf32>
    %35 = arith.addf %29, %34 : vector<8x8x48xf32>
    %36 = vector.shape_cast %35 : vector<8x8x48xf32> to vector<64x48xf32>
    %c0_6 = arith.constant 0 : index
    %c0_7 = arith.constant 0 : index
    %37 = vector.load %arg4[%c0_6, %c0_7] : memref<48x8xf32, #tpu.memory_space<vmem>>, vector<48x8xf32>
    %cst = arith.constant dense<0.000000e+00> : vector<64x8xf32>
    %38 = tpu.matmul %36, %37, %cst {dimension_numbers = #tpu.dot_dimension_numbers<[1], [0], [0], [1], [0, 0, 1, 1], [], []>} : vector<64x48xf32>, vector<48x8xf32>, vector<64x8xf32> -> vector<64x8xf32>
    %39 = vector.shape_cast %38 : vector<64x8xf32> to vector<8x8x8xf32>
    %c0_8 = arith.constant 0 : index
    %c0_9 = arith.constant 0 : index
    %c0_10 = arith.constant 0 : index
    %c0_11 = arith.constant 0 : index
    %40 = vector.load %arg5[%c0_8, %c0_9, %c0_10, %c0_11] : memref<1x8x8x8xf32, #tpu.memory_space<vmem>>, vector<1x8x8x8xf32>
    %41 = vector.shape_cast %40 : vector<1x8x8x8xf32> to vector<8x8x8xf32>
    %42 = vector.shape_cast %39 : vector<8x8x8xf32> to vector<1x8x8x8xf32>
    tpu.vector_store %arg5[%c0_8, %c0_9, %c0_10, %c0_11], %42 {strides = array<i32>} : memref<1x8x8x8xf32, #tpu.memory_space<vmem>>, vector<1x8x8x8xf32>,
    return
  }
  func.func @transform_0(%arg0: i32, %arg1: i32) -> (i32, i32, i32) {
    %c0_i32 = arith.constant 0 : i32
    %c0_i32_0 = arith.constant 0 : i32
    return %arg0, %arg1, %c0_i32 : i32, i32, i32
  }
  func.func @transform_1(%arg0: i32, %arg1: i32) -> (i32, i32, i32, i32) {
    %c0_i32 = arith.constant 0 : i32
    %c0_i32_0 = arith.constant 0 : i32
    %c0_i32_1 = arith.constant 0 : i32
    return %arg0, %arg1, %c0_i32, %c0_i32_0 : i32, i32, i32, i32
  }
  func.func @transform_2(%arg0: i32, %arg1: i32) -> (i32, i32) {
    %c0_i32 = arith.constant 0 : i32
    %c0_i32_0 = arith.constant 0 : i32
    %c0_i32_1 = arith.constant 0 : i32
    return %c0_i32, %c0_i32_0 : i32, i32
  }
  func.func @transform_3(%arg0: i32, %arg1: i32) -> (i32, i32, i32, i32) {
    %c0_i32 = arith.constant 0 : i32
    %c0_i32_0 = arith.constant 0 : i32
    %c0_i32_1 = arith.constant 0 : i32
    return %arg0, %arg1, %c0_i32, %c0_i32_0 : i32, i32, i32, i32
  }
}

</mosaic_0001>

<llo_original>
// kernel: graph_attn_bias.1
$region0: #{graph_attn_bias.1}
  #allocation0 [shape = 'u32[]', space=smem, size = 0x4, offset = 0x4, fixed_abs, tag = 'smem constant byte address 0x4 - core index']
  #allocation1 [shape = 'u32[144,128]{1,0:T(1,128)}', space=vmem, size = 0x12000, scoped, tag = 'internal scratch']
  %s0 = inlined_call_operand.vmem [shape: s32[2,8,8], index: 0, kind: input, shape index: {}]
  %s1 = inlined_call_operand.vmem [shape: s32[2,8,8,4], index: 1, kind: input, shape index: {}]
  %s2 = inlined_call_operand.vmem [shape: f32[48,8], index: 2, kind: input, shape index: {}]
  %s3 = inlined_call_operand.vmem [shape: f32[2,8,8,8], index: 3, kind: output, shape index: {}]
  %s4 = sld [smem:[#allocation0]]
  $region45: #{graph_attn_bias.1} parent=0
    _
  %s6 = ssub.s32 1, %s4
  %s7 = scalar_select 0, %s6, %s4
  loop: start=0, step=1, limit=4
  $region2: #{graph_attn_bias.1} parent=0 // loop_pre_header
    _
  $region3: #{graph_attn_bias.1} parent=0 // loop_header
    %s9 = sphi 0, %s13
    %p10 = scmp.ge.s32.totalorder %s9, 4
    %s16 = sphi 0, %s28
    %s17 = sphi 0, %s24
    %s18 = sphi 0, %s16
    %s19 = sphi 0, %s17
    %s20 = sphi 0, %s18
    %s21 = sphi 0, %s19
    %s33 = sphi 0, %s35
    %s36 = sphi 0, %s33
    %s37 = sphi 0, %s36
    %s53 = sphi 0, %s37
    %s61 = sphi 0, %s63
    %s64 = sphi 0, %s61
    %s65 = sphi 0, %s64
    %s81 = sphi 0, %s65
    %s85 = sphi 0, %s85
    %s87 = sphi 0, %s85
    %s88 = sphi 0, %s87
    %s102 = sphi 0, %s88
    %s110 = sphi 0, %s112
    %s113 = sphi 0, %s110
    %s114 = sphi 0, %s113
    %s130 = sphi 0, %s114
  $region4: #{graph_attn_bias.1} parent=0 // loop_header_branch
    %12 = sbr.rel (%p10) target = $region8
  $region5: #{graph_attn_bias.1} parent=0 // loop_body
    %s14 = ssub.s32 %s9, 1
    %s15 = ssub.s32 %s9, 2
    %s22 = sadd.s32 1, %s17
    %p23 = scmp.ge.s32.totalorder %s22, 1
    %s24 = scalar_select %p23, 0, %s22
    %s25 = sadd.s32 1, %s16
    %s26 = scalar_select %p23, %s25, %s16
    %p27 = scmp.ge.s32.totalorder %s26, 2
    %s28 = scalar_select %p27, 0, %s26
    %s29 = ssub.s32 %s16, %s28
    %s30 = ssub.s32 %s17, %s24
    %s31 = sor.u32 %s29, %s30
    %p32 = scmp.eq.s32.totalorder %s31, 0
    %s34 = sadd.s32 %s33, 1
    %s35 = scalar_select %p32, %s33, %s34
    %p38 = pneg %p32
    %p39 = scmp.eq.s32.totalorder %s9, 1
    %p40 = por %p38, %p39
    %p41 = scmp.ne.s32.totalorder %s33, %s36
    %p42 = scmp.eq.s32.totalorder %s9, 0
    %p43 = por %p41, %p42
    %p44 = scmp.ne.s32.totalorder %s33, %s36
    %p45 = scmp.eq.s32.totalorder %s14, 1
    %p46 = por %p44, %p45
    %p47 = scmp.ne.s32.totalorder %s36, %s37
    %p48 = scmp.eq.s32.totalorder %s14, 0
    %p49 = por %p47, %p48
    %p50 = scmp.ne.s32.totalorder %s36, %s37
    %p51 = scmp.eq.s32.totalorder %s15, 1
    %p52 = por %p50, %p51
    %p54 = scmp.ne.s32.totalorder %s37, %s53
    %p55 = scmp.eq.s32.totalorder %s15, 0
    %p56 = por %p54, %p55
    %s57 = ssub.s32 %s16, %s28
    %s58 = ssub.s32 %s17, %s24
    %s59 = sor.u32 %s57, %s58
    %p60 = scmp.eq.s32.totalorder %s59, 0
    %s62 = sadd.s32 %s61, 1
    %s63 = scalar_select %p60, %s61, %s62
    %p66 = pneg %p60
    %p67 = scmp.eq.s32.totalorder %s9, 1
    %p68 = por %p66, %p67
    %p69 = scmp.ne.s32.totalorder %s61, %s64
    %p70 = scmp.eq.s32.totalorder %s9, 0
    %p71 = por %p69, %p70
    %p72 = scmp.ne.s32.totalorder %s61, %s64
    %p73 = scmp.eq.s32.totalorder %s14, 1
    %p74 = por %p72, %p73
    %p75 = scmp.ne.s32.totalorder %s64, %s65
    %p76 = scmp.eq.s32.totalorder %s14, 0
    %p77 = por %p75, %p76
    %p78 = scmp.ne.s32.totalorder %s64, %s65
    %p79 = scmp.eq.s32.totalorder %s15, 1
    %p80 = por %p78, %p79
    %p82 = scmp.ne.s32.totalorder %s65, %s81
    %p83 = scmp.eq.s32.totalorder %s15, 0
    %p84 = por %p82, %p83
    %s86 = sadd.s32 %s85, 1
    %p89 = scmp.eq.s32.totalorder %s9, 1
    %p90 = scmp.ne.s32.totalorder %s85, %s87
    %p91 = scmp.eq.s32.totalorder %s9, 0
    %p92 = por %p90, %p91
    %p93 = scmp.ne.s32.totalorder %s85, %s87
    %p94 = scmp.eq.s32.totalorder %s14, 1
    %p95 = por %p93, %p94
    %p96 = scmp.ne.s32.totalorder %s87, %s88
    %p97 = scmp.eq.s32.totalorder %s14, 0
    %p98 = por %p96, %p97
    %p99 = scmp.ne.s32.totalorder %s87, %s88
    %p100 = scmp.eq.s32.totalorder %s15, 1
    %p101 = por %p99, %p100
    %p103 = scmp.ne.s32.totalorder %s88, %s102
    %p104 = scmp.eq.s32.totalorder %s15, 0
    %p105 = por %p103, %p104
    %s106 = ssub.s32 %s16, %s28
    %s107 = ssub.s32 %s17, %s24
    %s108 = sor.u32 %s106, %s107
    %p109 = scmp.eq.s32.totalorder %s108, 0
    %s111 = sadd.s32 %s110, 1
    %s112 = scalar_select %p109, %s110, %s111
    %p115 = pneg %p109
    %p116 = scmp.eq.s32.totalorder %s9, 1
    %p117 = por %p115, %p116
    %p118 = scmp.ne.s32.totalorder %s110, %s113
    %p119 = scmp.eq.s32.totalorder %s9, 0
    %p120 = por %p118, %p119
    %p121 = scmp.ne.s32.totalorder %s110, %s113
    %p122 = scmp.eq.s32.totalorder %s14, 1
    %p123 = por %p121, %p122
    %p124 = scmp.ne.s32.totalorder %s113, %s114
    %p125 = scmp.eq.s32.totalorder %s14, 0
    %p126 = por %p124, %p125
    %p127 = scmp.ne.s32.totalorder %s113, %s114
    %p128 = scmp.eq.s32.totalorder %s15, 1
    %p129 = por %p127, %p128
    %p131 = scmp.ne.s32.totalorder %s114, %s130
    %p132 = scmp.eq.s32.totalorder %s15, 0
    %p133 = por %p131, %p132
    %p134 = scmp.le.s32.totalorder 1, %s9
    %p135 = scmp.lt.s32.totalorder %s9, 3
    %p136 = pnand %p134, %p135
    %p137 = pneg %p136
    // Predicated region
    $region9: #{graph_attn_bias.1} parent=5 // pred_check
      _
    $region10: #{graph_attn_bias.1} parent=5 // pred_check_branch
      %139 = sbr.rel (%p136) target = $region12
    $region11: #{graph_attn_bias.1} parent=5 // pred_region
      %s140 = ssub.s32 %s9, 1
      // Predicated region
      $region13: #{graph_attn_bias.1} parent=11 // pred_check
        %p141 = pneg %p98
      $region14: #{graph_attn_bias.1} parent=11 // pred_check_branch
        %143 = sbr.rel (%p141) target = $region16
      $region15: #{graph_attn_bias.1} parent=11 // pred_region
        _
      $region16: #{graph_attn_bias.1} parent=11 // pred_fallthru
        _
    $region12: #{graph_attn_bias.1} parent=5 // pred_fallthru
      _
    %p144 = scmp.lt.s32.totalorder %s9, 2
    // Predicated region
    $region17: #{graph_attn_bias.1} parent=5 // pred_check
      %p145 = pneg %p144
    $region18: #{graph_attn_bias.1} parent=5 // pred_check_branch
      %147 = sbr.rel (%p145) target = $region20
    $region19: #{graph_attn_bias.1} parent=5 // pred_region
      // Predicated region
      $region21: #{graph_attn_bias.1} parent=19 // pred_check
        %p148 = pneg %p43
      $region22: #{graph_attn_bias.1} parent=19 // pred_check_branch
        %150 = sbr.rel (%p148) target = $region24
      $region23: #{graph_attn_bias.1} parent=19 // pred_region
        %p151 = scmp.lt.s32.totalorder %s16, 1
        %s152 = scalar_select %p151, %s16, 1
        %p153 = scmp.lt.s32.totalorder %s17, 0
        %s154 = scalar_select %p153, %s17, 0
        %s155 = sadd.s32 %s154, %s152
        %s156 = smul.addr %s155, 8
        %s157 = scalar_lea.vmem %s0, %s156
      $region24: #{graph_attn_bias.1} parent=19 // pred_fallthru
        _
      // Predicated region
      $region25: #{graph_attn_bias.1} parent=19 // pred_check
        %p158 = pneg %p71
      $region26: #{graph_attn_bias.1} parent=19 // pred_check_branch
        %160 = sbr.rel (%p158) target = $region28
      $region27: #{graph_attn_bias.1} parent=19 // pred_region
        %s161 = smul.u32 8, %s17
        %p162 = scmp.lt.s32.totalorder %s16, 1
        %s163 = scalar_select %p162, %s16, 1
        %p164 = scmp.lt.s32.totalorder %s161, 7
        %s165 = scalar_select %p164, %s161, 7
        %s166 = smul.addr %s163, 8
        %s167 = sadd.s32 %s165, %s166
        %s168 = smul.addr %s167, 8
        %s169 = scalar_lea.vmem %s1, %s168
        %s170 = smul.u32 8, %s17
      $region28: #{graph_attn_bias.1} parent=19 // pred_fallthru
        _
    $region20: #{graph_attn_bias.1} parent=5 // pred_fallthru
      _
    %p171 = scmp.le.s32.totalorder 1, %s9
    %p172 = scmp.lt.s32.totalorder %s9, 3
    %p173 = pnand %p171, %p172
    %p174 = pneg %p173
    // Predicated region
    $region29: #{graph_attn_bias.1} parent=5 // pred_check
      _
    $region30: #{graph_attn_bias.1} parent=5 // pred_check_branch
      %176 = sbr.rel (%p173) target = $region32
    $region31: #{graph_attn_bias.1} parent=5 // pred_region
      %s177 = ssub.s32 %s9, 1
      %p178 = scmp.lt.s32.totalorder %s18, 1
      %s179 = scalar_select %p178, %s18, 1
      %p180 = scmp.lt.s32.totalorder %s19, 0
      %s181 = scalar_select %p180, %s19, 0
      %s182 = sadd.s32 %s181, %s179
      %s183 = smul.addr %s182, 8
      %s184 = scalar_lea.vmem %s0, %s183
      %p185 = pneg %p49
      %p186 = pneg %p46
      %s187 = smul.u32 8, %s19
      %p188 = scmp.lt.s32.totalorder %s18, 1
      %s189 = scalar_select %p188, %s18, 1
      %p190 = scmp.lt.s32.totalorder %s187, 7
      %s191 = scalar_select %p190, %s187, 7
      %s192 = smul.addr %s189, 8
      %s193 = sadd.s32 %s191, %s192
      %s194 = smul.addr %s193, 8
      %s195 = scalar_lea.vmem %s1, %s194
      %p196 = pneg %p77
      %p197 = pneg %p74
      %p198 = pneg %p98
      %p199 = pneg %p95
      %p200 = pneg %p126
      %p201 = pneg %p123
      %s202 = smul.u32 8, %s19
      %p203 = scmp.lt.s32.totalorder %s18, 1
      %s204 = scalar_select %p203, %s18, 1
      %p205 = scmp.lt.s32.totalorder %s202, 7
      %s206 = scalar_select %p205, %s202, 7
      %s207 = smul.addr %s204, 8
      %s208 = sadd.s32 %s206, %s207
      %s209 = smul.addr %s208, 8
      %s210 = scalar_lea.vmem %s3, %s209
      %p211 = scmp.lt.s32.totalorder %s18, 1
      %s212 = scalar_select %p211, %s18, 1
      %p213 = scmp.lt.s32.totalorder %s19, 0
      %s214 = scalar_select %p213, %s19, 0
      %s215 = sadd.s32 %s214, %s212
      %s216 = smul.addr %s215, 8
      %s217 = scalar_lea.vmem %s0, %s216
      %s218 = smul.u32 8, %s19
      %p219 = scmp.lt.s32.totalorder %s18, 1
      %s220 = scalar_select %p219, %s18, 1
      %p221 = scmp.lt.s32.totalorder %s218, 7
      %s222 = scalar_select %p221, %s218, 7
      %s223 = smul.addr %s220, 8
      %s224 = sadd.s32 %s222, %s223
      %s225 = smul.addr %s224, 8
      %s226 = scalar_lea.vmem %s1, %s225
      %s227 = smul.u32 8, %s19
      %s228 = smul.u32 8, %s19
      %p229 = scmp.lt.s32.totalorder %s18, 1
      %s230 = scalar_select %p229, %s18, 1
      %p231 = scmp.lt.s32.totalorder %s228, 7
      %s232 = scalar_select %p231, %s228, 7
      %s233 = smul.addr %s230, 8
      %s234 = sadd.s32 %s232, %s233
      %s235 = smul.addr %s234, 8
      %s236 = scalar_lea.vmem %s3, %s235
      %s237 = smul.u32 8, %s19
      %v238 = vlaneseq
      %v239 = vand.u32 %v238, 127
      %v240 = vld [vmem:[%s217] sm:$0xff]
      %v241 = vlaneseq
      %v242 = vshrl.u32 %v241, 7
      %v243 = vsub.s32 0, %v242
      %v244 = vrot.slane %v240, %v243
      %246 = vbcast.lane.b32.xlu0 %v244, 256
      %v247 = vpop.permute.xlu0 %246
      %v248 = vlaneseq
      %v249 = vshrl.u32 %v248, 7
      %v250 = vsub.s32 1, %v249
      %v251 = vrot.slane %v240, %v250
      %253 = vbcast.lane.b32.xlu0 %v251, 256
      %v254 = vpop.permute.xlu0 %253
      %v255 = vlaneseq
      %v256 = vshrl.u32 %v255, 7
      %v257 = vsub.s32 2, %v256
      %v258 = vrot.slane %v240, %v257
      %260 = vbcast.lane.b32.xlu0 %v258, 256
      %v261 = vpop.permute.xlu0 %260
      %v262 = vlaneseq
      %v263 = vshrl.u32 %v262, 7
      %v264 = vsub.s32 3, %v263
      %v265 = vrot.slane %v240, %v264
      %267 = vbcast.lane.b32.xlu0 %v265, 256
      %v268 = vpop.permute.xlu0 %267
      %v269 = vlaneseq
      %v270 = vshrl.u32 %v269, 7
      %v271 = vsub.s32 4, %v270
      %v272 = vrot.slane %v240, %v271
      %274 = vbcast.lane.b32.xlu0 %v272, 256
      %v275 = vpop.permute.xlu0 %274
      %v276 = vlaneseq
      %v277 = vshrl.u32 %v276, 7
      %v278 = vsub.s32 5, %v277
      %v279 = vrot.slane %v240, %v278
      %281 = vbcast.lane.b32.xlu0 %v279, 256
      %v282 = vpop.permute.xlu0 %281
      %v283 = vlaneseq
      %v284 = vshrl.u32 %v283, 7
      %v285 = vsub.s32 6, %v284
      %v286 = vrot.slane %v240, %v285
      %288 = vbcast.lane.b32.xlu0 %v286, 256
      %v289 = vpop.permute.xlu0 %288
      %v290 = vlaneseq
      %v291 = vshrl.u32 %v290, 7
      %v292 = vsub.s32 7, %v291
      %v293 = vrot.slane %v240, %v292
      %295 = vbcast.lane.b32.xlu0 %v293, 256
      %v296 = vpop.permute.xlu0 %295
      %vm297 = vcmp.eq.s32.totalorder %v247, %v239
      %vm298 = vcmp.eq.s32.totalorder %v254, %v239
      %vm299 = vcmp.eq.s32.totalorder %v261, %v239
      %vm300 = vcmp.eq.s32.totalorder %v268, %v239
      %vm301 = vcmp.eq.s32.totalorder %v275, %v239
      %vm302 = vcmp.eq.s32.totalorder %v282, %v239
      %vm303 = vcmp.eq.s32.totalorder %v289, %v239
      %vm304 = vcmp.eq.s32.totalorder %v296, %v239
      %v305 = vsel %vm297, 1, 0
      %v306 = vsel %vm298, 1, 0
      %v307 = vsel %vm299, 1, 0
      %v308 = vsel %vm300, 1, 0
      %v309 = vsel %vm301, 1, 0
      %v310 = vsel %vm302, 1, 0
      %v311 = vsel %vm303, 1, 0
      %v312 = vsel %vm304, 1, 0
      %v313 = vcvt.s32.f32 %v305
      %v314 = vcvt.s32.f32 %v306
      %v315 = vcvt.s32.f32 %v307
      %v316 = vcvt.s32.f32 %v308
      %v317 = vcvt.s32.f32 %v309
      %v318 = vcvt.s32.f32 %v310
      %v319 = vcvt.s32.f32 %v311
      %v320 = vcvt.s32.f32 %v312
      %v321 = vld [vmem:[%s226] sm:$0xff]
      %v322 = vld [vmem:[%s226 + $0x8] sm:$0xff]
      %v323 = vld [vmem:[%s226 + $0x10] sm:$0xff]
      %v324 = vld [vmem:[%s226 + $0x18] sm:$0xff]
      %v325 = vld [vmem:[%s226 + $0x20] sm:$0xff]
      %v326 = vld [vmem:[%s226 + $0x28] sm:$0xff]
      %v327 = vld [vmem:[%s226 + $0x30] sm:$0xff]
      %v328 = vld [vmem:[%s226 + $0x38] sm:$0xff]
      %v329 = vadd.s32 %v321, 16
      %v330 = vadd.s32 %v322, 16
      %v331 = vadd.s32 %v323, 16
      %v332 = vadd.s32 %v324, 16
      %v333 = vadd.s32 %v325, 16
      %v334 = vadd.s32 %v326, 16
      %v335 = vadd.s32 %v327, 16
      %v336 = vadd.s32 %v328, 16
      %337 = vset.pattern.permute.xlu0 0
      %338 = vperm.xlu0 %337, %v329
      %v339 = vpop.permute.xlu0 %338
      %340 = vset.pattern.permute.xlu0 0
      %341 = vperm.xlu0 %340, %v330
      %v342 = vpop.permute.xlu0 %341
      %343 = vset.pattern.permute.xlu0 0
      %344 = vperm.xlu0 %343, %v331
      %v345 = vpop.permute.xlu0 %344
      %346 = vset.pattern.permute.xlu0 0
      %347 = vperm.xlu0 %346, %v332
      %v348 = vpop.permute.xlu0 %347
      %349 = vset.pattern.permute.xlu0 0
      %350 = vperm.xlu0 %349, %v333
      %v351 = vpop.permute.xlu0 %350
      %352 = vset.pattern.permute.xlu0 0
      %353 = vperm.xlu0 %352, %v334
      %v354 = vpop.permute.xlu0 %353
      %355 = vset.pattern.permute.xlu0 0
      %356 = vperm.xlu0 %355, %v335
      %v357 = vpop.permute.xlu0 %356
      %358 = vset.pattern.permute.xlu0 0
      %359 = vperm.xlu0 %358, %v336
      %v360 = vpop.permute.xlu0 %359
      %vm361 = vcmp.eq.s32.totalorder %v339, %v239
      %vm362 = vcmp.eq.s32.totalorder %v342, %v239
      %vm363 = vcmp.eq.s32.totalorder %v345, %v239
      %vm364 = vcmp.eq.s32.totalorder %v348, %v239
      %vm365 = vcmp.eq.s32.totalorder %v351, %v239
      %vm366 = vcmp.eq.s32.totalorder %v354, %v239
      %vm367 = vcmp.eq.s32.totalorder %v357, %v239
      %vm368 = vcmp.eq.s32.totalorder %v360, %v239
      %v369 = vsel %vm361, 1, 0
      %v370 = vsel %vm362, 1, 0
      %v371 = vsel %vm363, 1, 0
      %v372 = vsel %vm364, 1, 0
      %v373 = vsel %vm365, 1, 0
      %v374 = vsel %vm366, 1, 0
      %v375 = vsel %vm367, 1, 0
      %v376 = vsel %vm368, 1, 0
      %v377 = vcvt.s32.f32 %v369
      %v378 = vcvt.s32.f32 %v370
      %v379 = vcvt.s32.f32 %v371
      %v380 = vcvt.s32.f32 %v372
      %v381 = vcvt.s32.f32 %v373
      %v382 = vcvt.s32.f32 %v374
      %v383 = vcvt.s32.f32 %v375
      %v384 = vcvt.s32.f32 %v376
      %v385 = vadd.f32 %v313, %v377
      %v386 = vadd.f32 %v314, %v378
      %v387 = vadd.f32 %v315, %v379
      %v388 = vadd.f32 %v316, %v380
      %v389 = vadd.f32 %v317, %v381
      %v390 = vadd.f32 %v318, %v382
      %v391 = vadd.f32 %v319, %v383
      %v392 = vadd.f32 %v320, %v384
      %393 = vset.pattern.permute.xlu0 1
      %394 = vperm.xlu0 %393, %v329
      %v395 = vpop.permute.xlu0 %394
      %396 = vset.pattern.permute.xlu0 1
      %397 = vperm.xlu0 %396, %v330
      %v398 = vpop.permute.xlu0 %397
      %399 = vset.pattern.permute.xlu0 1
      %400 = vperm.xlu0 %399, %v331
      %v401 = vpop.permute.xlu0 %400
      %402 = vset.pattern.permute.xlu0 1
      %403 = vperm.xlu0 %402, %v332
      %v404 = vpop.permute.xlu0 %403
      %405 = vset.pattern.permute.xlu0 1
      %406 = vperm.xlu0 %405, %v333
      %v407 = vpop.permute.xlu0 %406
      %408 = vset.pattern.permute.xlu0 1
      %409 = vperm.xlu0 %408, %v334
      %v410 = vpop.permute.xlu0 %409
      %411 = vset.pattern.permute.xlu0 1
      %412 = vperm.xlu0 %411, %v335
      %v413 = vpop.permute.xlu0 %412
      %414 = vset.pattern.permute.xlu0 1
      %415 = vperm.xlu0 %414, %v336
      %v416 = vpop.permute.xlu0 %415
      %vm417 = vcmp.eq.s32.totalorder %v395, %v239
      %vm418 = vcmp.eq.s32.totalorder %v398, %v239
      %vm419 = vcmp.eq.s32.totalorder %v401, %v239
      %vm420 = vcmp.eq.s32.totalorder %v404, %v239
      %vm421 = vcmp.eq.s32.totalorder %v407, %v239
      %vm422 = vcmp.eq.s32.totalorder %v410, %v239
      %vm423 = vcmp.eq.s32.totalorder %v413, %v239
      %vm424 = vcmp.eq.s32.totalorder %v416, %v239
      %v425 = vsel %vm417, 1, 0
      %v426 = vsel %vm418, 1, 0
      %v427 = vsel %vm419, 1, 0
      %v428 = vsel %vm420, 1, 0
      %v429 = vsel %vm421, 1, 0
      %v430 = vsel %vm422, 1, 0
      %v431 = vsel %vm423, 1, 0
      %v432 = vsel %vm424, 1, 0
      %v433 = vcvt.s32.f32 %v425
      %v434 = vcvt.s32.f32 %v426
      %v435 = vcvt.s32.f32 %v427
      %v436 = vcvt.s32.f32 %v428
      %v437 = vcvt.s32.f32 %v429
      %v438 = vcvt.s32.f32 %v430
      %v439 = vcvt.s32.f32 %v431
      %v440 = vcvt.s32.f32 %v432
      %v441 = vadd.f32 %v385, %v433
      %v442 = vadd.f32 %v386, %v434
      %v443 = vadd.f32 %v387, %v435
      %v444 = vadd.f32 %v388, %v436
      %v445 = vadd.f32 %v389, %v437
      %v446 = vadd.f32 %v390, %v438
      %v447 = vadd.f32 %v391, %v439
      %v448 = vadd.f32 %v392, %v440
      %449 = vset.pattern.permute.xlu0 2
      %450 = vperm.xlu0 %449, %v329
      %v451 = vpop.permute.xlu0 %450
      %452 = vset.pattern.permute.xlu0 2
      %453 = vperm.xlu0 %452, %v330
      %v454 = vpop.permute.xlu0 %453
      %455 = vset.pattern.permute.xlu0 2
      %456 = vperm.xlu0 %455, %v331
      %v457 = vpop.permute.xlu0 %456
      %458 = vset.pattern.permute.xlu0 2
      %459 = vperm.xlu0 %458, %v332
      %v460 = vpop.permute.xlu0 %459
      %461 = vset.pattern.permute.xlu0 2
      %462 = vperm.xlu0 %461, %v333
      %v463 = vpop.permute.xlu0 %462
      %464 = vset.pattern.permute.xlu0 2
      %465 = vperm.xlu0 %464, %v334
      %v466 = vpop.permute.xlu0 %465
      %467 = vset.pattern.permute.xlu0 2
      %468 = vperm.xlu0 %467, %v335
      %v469 = vpop.permute.xlu0 %468
      %470 = vset.pattern.permute.xlu0 2
      %471 = vperm.xlu0 %470, %v336
      %v472 = vpop.permute.xlu0 %471
      %vm473 = vcmp.eq.s32.totalorder %v451, %v239
      %vm474 = vcmp.eq.s32.totalorder %v454, %v239
      %vm475 = vcmp.eq.s32.totalorder %v457, %v239
      %vm476 = vcmp.eq.s32.totalorder %v460, %v239
      %vm477 = vcmp.eq.s32.totalorder %v463, %v239
      %vm478 = vcmp.eq.s32.totalorder %v466, %v239
      %vm479 = vcmp.eq.s32.totalorder %v469, %v239
      %vm480 = vcmp.eq.s32.totalorder %v472, %v239
      %v481 = vsel %vm473, 1, 0
      %v482 = vsel %vm474, 1, 0
      %v483 = vsel %vm475, 1, 0
      %v484 = vsel %vm476, 1, 0
      %v485 = vsel %vm477, 1, 0
      %v486 = vsel %vm478, 1, 0
      %v487 = vsel %vm479, 1, 0
      %v488 = vsel %vm480, 1, 0
      %v489 = vcvt.s32.f32 %v481
      %v490 = vcvt.s32.f32 %v482
      %v491 = vcvt.s32.f32 %v483
      %v492 = vcvt.s32.f32 %v484
      %v493 = vcvt.s32.f32 %v485
      %v494 = vcvt.s32.f32 %v486
      %v495 = vcvt.s32.f32 %v487
      %v496 = vcvt.s32.f32 %v488
      %v497 = vadd.f32 %v441, %v489
      %v498 = vadd.f32 %v442, %v490
      %v499 = vadd.f32 %v443, %v491
      %v500 = vadd.f32 %v444, %v492
      %v501 = vadd.f32 %v445, %v493
      %v502 = vadd.f32 %v446, %v494
      %v503 = vadd.f32 %v447, %v495
      %v504 = vadd.f32 %v448, %v496
      %505 = vset.pattern.permute.xlu0 3
      %506 = vperm.xlu0 %505, %v329
      %v507 = vpop.permute.xlu0 %506
      %508 = vset.pattern.permute.xlu0 3
      %509 = vperm.xlu0 %508, %v330
      %v510 = vpop.permute.xlu0 %509
      %511 = vset.pattern.permute.xlu0 3
      %512 = vperm.xlu0 %511, %v331
      %v513 = vpop.permute.xlu0 %512
      %514 = vset.pattern.permute.xlu0 3
      %515 = vperm.xlu0 %514, %v332
      %v516 = vpop.permute.xlu0 %515
      %517 = vset.pattern.permute.xlu0 3
      %518 = vperm.xlu0 %517, %v333
      %v519 = vpop.permute.xlu0 %518
      %520 = vset.pattern.permute.xlu0 3
      %521 = vperm.xlu0 %520, %v334
      %v522 = vpop.permute.xlu0 %521
      %523 = vset.pattern.permute.xlu0 3
      %524 = vperm.xlu0 %523, %v335
      %v525 = vpop.permute.xlu0 %524
      %526 = vset.pattern.permute.xlu0 3
      %527 = vperm.xlu0 %526, %v336
      %v528 = vpop.permute.xlu0 %527
      %vm529 = vcmp.eq.s32.totalorder %v507, %v239
      %vm530 = vcmp.eq.s32.totalorder %v510, %v239
      %vm531 = vcmp.eq.s32.totalorder %v513, %v239
      %vm532 = vcmp.eq.s32.totalorder %v516, %v239
      %vm533 = vcmp.eq.s32.totalorder %v519, %v239
      %vm534 = vcmp.eq.s32.totalorder %v522, %v239
      %vm535 = vcmp.eq.s32.totalorder %v525, %v239
      %vm536 = vcmp.eq.s32.totalorder %v528, %v239
      %v537 = vsel %vm529, 1, 0
      %v538 = vsel %vm530, 1, 0
      %v539 = vsel %vm531, 1, 0
      %v540 = vsel %vm532, 1, 0
      %v541 = vsel %vm533, 1, 0
      %v542 = vsel %vm534, 1, 0
      %v543 = vsel %vm535, 1, 0
      %v544 = vsel %vm536, 1, 0
      %v545 = vcvt.s32.f32 %v537
      %v546 = vcvt.s32.f32 %v538
      %v547 = vcvt.s32.f32 %v539
      %v548 = vcvt.s32.f32 %v540
      %v549 = vcvt.s32.f32 %v541
      %v550 = vcvt.s32.f32 %v542
      %v551 = vcvt.s32.f32 %v543
      %v552 = vcvt.s32.f32 %v544
      %v553 = vadd.f32 %v497, %v545
      %v554 = vadd.f32 %v498, %v546
      %v555 = vadd.f32 %v499, %v547
      %v556 = vadd.f32 %v500, %v548
      %v557 = vadd.f32 %v501, %v549
      %v558 = vadd.f32 %v502, %v550
      %v559 = vadd.f32 %v503, %v551
      %v560 = vadd.f32 %v504, %v552
      %v561 = vld [vmem:[%s2] sm:$0xff]
      %v562 = vld [vmem:[%s2 + $0x8] sm:$0xff]
      %v563 = vld [vmem:[%s2 + $0x10] sm:$0xff]
      %v564 = vld [vmem:[%s2 + $0x18] sm:$0xff]
      %v565 = vld [vmem:[%s2 + $0x20] sm:$0xff]
      %v566 = vld [vmem:[%s2 + $0x28] sm:$0xff]
      %vm567 = vcmask 392192
      %v569 = vsel %vm567, %v553, 0
      %v572 = vsel %vm567, %v554, 0
      %v575 = vsel %vm567, %v555, 0
      %v578 = vsel %vm567, %v556, 0
      %v581 = vsel %vm567, %v557, 0
      %v584 = vsel %vm567, %v558, 0
      %v587 = vsel %vm567, %v559, 0
      %v590 = vsel %vm567, %v560, 0
      %592 = vmatprep.subr.mxu0 0.0
      %593 = vmatpush1.msra.mxu0 %v561
      %594 = vmatprep.subr.mxu0 0.0
      %595 = vmatpush1.msra.mxu0 %v562
      %596 = vmatprep.subr.mxu0 0.0
      %597 = vmatpush1.msra.mxu0 %v563
      %598 = vmatprep.subr.mxu0 0.0
      %599 = vmatpush1.msra.mxu0 %v564
      %600 = vmatprep.subr.mxu0 0.0
      %601 = vmatpush1.msra.mxu0 %v565
      %602 = vmatprep.subr.mxu0 0.0
      %603 = vmatpush1.msra.mxu0 %v566
      %604 = vmatprep.subr.mxu0 0.0
      %605 = vmatpush1.msra.mxu0 0.0
      %606 = vmatprep.subr.mxu0 0.0
      %607 = vmatpush1.msra.mxu0 0.0
      %608 = vmatprep.subr.mxu0 0.0
      %609 = vmatpush1.msra.mxu0 0.0
      %610 = vmatprep.subr.mxu0 0.0
      %611 = vmatpush1.msra.mxu0 0.0
      %612 = vmatprep.subr.mxu0 0.0
      %613 = vmatpush1.msra.mxu0 0.0
      %614 = vmatprep.subr.mxu0 0.0
      %615 = vmatpush1.msra.mxu0 0.0
      %616 = vmatprep.subr.mxu0 0.0
      %617 = vmatpush1.msra.mxu0 0.0
      %618 = vmatprep.subr.mxu0 0.0
      %619 = vmatpush1.msra.mxu0 0.0
      %620 = vmatprep.subr.mxu0 0.0
      %621 = vmatpush1.msra.mxu0 0.0
      %622 = vmatprep.subr.mxu0 0.0
      %623 = vmatpush1.msra.mxu0 0.0
      %624 = vmatprep.subr.mxu0 0.0
      %625 = vmatpush1.msra.mxu0 0.0
      %626 = vmatprep.subr.mxu0 0.0
      %627 = vmatpush1.msra.mxu0 0.0
      %628 = vmatprep.subr.mxu0 0.0
      %629 = vmatpush1.msra.mxu0 0.0
      %630 = vmatprep.subr.mxu0 0.0
      %631 = vmatpush1.msra.mxu0 0.0
      %632 = vmatprep.subr.mxu0 0.0
      %633 = vmatpush1.msra.mxu0 0.0
      %634 = vmatprep.subr.mxu0 0.0
      %635 = vmatpush1.msra.mxu0 0.0
      %636 = vmatprep.subr.mxu0 0.0
      %637 = vmatpush1.msra.mxu0 0.0
      %638 = vmatprep.subr.mxu0 0.0
      %639 = vmatpush1.msra.mxu0 0.0
      %640 = vmatprep.subr.mxu0 0.0
      %641 = vmatpush1.msra.mxu0 0.0
      %642 = vmatprep.subr.mxu0 0.0
      %643 = vmatpush1.msra.mxu0 0.0
      %644 = vmatprep.subr.mxu0 0.0
      %645 = vmatpush1.msra.mxu0 0.0
      %646 = vmatprep.subr.mxu0 0.0
      %647 = vmatpush1.msra.mxu0 0.0
      %648 = vmatprep.subr.mxu0 0.0
      %649 = vmatpush1.msra.mxu0 0.0
      %650 = vmatprep.subr.mxu0 0.0
      %651 = vmatpush1.msra.mxu0 0.0
      %652 = vmatprep.subr.mxu0 0.0
      %653 = vmatpush1.msra.mxu0 0.0
      %654 = vmatprep.subr.mxu0 0.0
      %655 = vmatpush1.msra.mxu0 0.0
      %656 = vmatprep.mubr.f32.mxu0 0.0
      %657 = vmatmul.mubr.f32.gmra.mrb[0].mxu0 %v569
      %v658 = vpop.f32.mrb[0].mxu0
      %v659 = vadd.f32 0.0, %v658
      %v660 = vpop.f32.mrb[0].mxu0
      %661 = vmatprep.mubr.f32.mxu0 0.0
      %662 = vmatmul.mubr.f32.gmra.mrb[0].mxu0 %v572
      %v663 = vpop.f32.mrb[0].mxu0
      %v664 = vadd.f32 0.0, %v663
      %v665 = vpop.f32.mrb[0].mxu0
      %666 = vmatprep.mubr.f32.mxu0 0.0
      %667 = vmatmul.mubr.f32.gmra.mrb[0].mxu0 %v575
      %v668 = vpop.f32.mrb[0].mxu0
      %v669 = vadd.f32 0.0, %v668
      %v670 = vpop.f32.mrb[0].mxu0
      %671 = vmatprep.mubr.f32.mxu0 0.0
      %672 = vmatmul.mubr.f32.gmra.mrb[0].mxu0 %v578
      %v673 = vpop.f32.mrb[0].mxu0
      %v674 = vadd.f32 0.0, %v673
      %v675 = vpop.f32.mrb[0].mxu0
      %676 = vmatprep.mubr.f32.mxu0 0.0
      %677 = vmatmul.mubr.f32.gmra.mrb[0].mxu0 %v581
      %v678 = vpop.f32.mrb[0].mxu0
      %v679 = vadd.f32 0.0, %v678
      %v680 = vpop.f32.mrb[0].mxu0
      %681 = vmatprep.mubr.f32.mxu0 0.0
      %682 = vmatmul.mubr.f32.gmra.mrb[0].mxu0 %v584
      %v683 = vpop.f32.mrb[0].mxu0
      %v684 = vadd.f32 0.0, %v683
      %v685 = vpop.f32.mrb[0].mxu0
      %686 = vmatprep.mubr.f32.mxu0 0.0
      %687 = vmatmul.mubr.f32.gmra.mrb[0].mxu0 %v587
      %v688 = vpop.f32.mrb[0].mxu0
      %v689 = vadd.f32 0.0, %v688
      %v690 = vpop.f32.mrb[0].mxu0
      %691 = vmatprep.mubr.f32.mxu0 0.0
      %692 = vmatmul.mubr.f32.gmra.mrb[0].mxu0 %v590
      %v693 = vpop.f32.mrb[0].mxu0
      %v694 = vadd.f32 0.0, %v693
      %v695 = vpop.f32.mrb[0].mxu0
      %696 = vdwg.mxu0
      %vm697 = vcmask 64512
      %698 = vst.msk [vmem:[%s236] sm:$0xff] %vm697, %v659
      %699 = vst.msk [vmem:[%s236 + $0x8] sm:$0xff] %vm697, %v664
      %700 = vst.msk [vmem:[%s236 + $0x10] sm:$0xff] %vm697, %v669
      %701 = vst.msk [vmem:[%s236 + $0x18] sm:$0xff] %vm697, %v674
      %702 = vst.msk [vmem:[%s236 + $0x20] sm:$0xff] %vm697, %v679
      %703 = vst.msk [vmem:[%s236 + $0x28] sm:$0xff] %vm697, %v684
      %704 = vst.msk [vmem:[%s236 + $0x30] sm:$0xff] %vm697, %v689
      %705 = vst.msk [vmem:[%s236 + $0x38] sm:$0xff] %vm697, %v694
      %s706 = smul.u32 8, %s19
      %p707 = scmp.lt.s32.totalorder %s18, 1
      %s708 = scalar_select %p707, %s18, 1
      %p709 = scmp.lt.s32.totalorder %s706, 7
      %s710 = scalar_select %p709, %s706, 7
      %s711 = smul.addr %s708, 8
      %s712 = sadd.s32 %s710, %s711
      %s713 = smul.addr %s712, 8
      %s714 = scalar_lea.vmem %s3, %s713
      // Predicated region
      $region33: #{graph_attn_bias.1} parent=31 // pred_check
        %p715 = pneg %p123
      $region34: #{graph_attn_bias.1} parent=31 // pred_check_branch
        %717 = sbr.rel (%p715) target = $region36
      $region35: #{graph_attn_bias.1} parent=31 // pred_region
        %s718 = smul.u32 8, %s19
      $region36: #{graph_attn_bias.1} parent=31 // pred_fallthru
        _
    $region32: #{graph_attn_bias.1} parent=5 // pred_fallthru
      _
    %p719 = scmp.le.s32.totalorder 2, %s9
    // Predicated region
    $region37: #{graph_attn_bias.1} parent=5 // pred_check
      %p720 = pneg %p719
    $region38: #{graph_attn_bias.1} parent=5 // pred_check_branch
      %722 = sbr.rel (%p720) target = $region40
    $region39: #{graph_attn_bias.1} parent=5 // pred_region
      %s723 = ssub.s32 %s9, 2
      // Predicated region
      $region41: #{graph_attn_bias.1} parent=39 // pred_check
        %p724 = pneg %p129
      $region42: #{graph_attn_bias.1} parent=39 // pred_check_branch
        %726 = sbr.rel (%p724) target = $region44
      $region43: #{graph_attn_bias.1} parent=39 // pred_region
        %s727 = smul.u32 8, %s21
        %p728 = scmp.lt.s32.totalorder %s20, 1
        %s729 = scalar_select %p728, %s20, 1
        %p730 = scmp.lt.s32.totalorder %s727, 7
        %s731 = scalar_select %p730, %s727, 7
        %s732 = smul.addr %s729, 8
        %s733 = sadd.s32 %s731, %s732
        %s734 = smul.addr %s733, 8
        %s735 = scalar_lea.vmem %s3, %s734
      $region44: #{graph_attn_bias.1} parent=39 // pred_fallthru
        _
    $region40: #{graph_attn_bias.1} parent=5 // pred_fallthru
      _
  $region6: #{graph_attn_bias.1} parent=0 // loop_footer
    %s13 = sadd.s32 1, %s9
  $region7: #{graph_attn_bias.1} parent=0 // loop_footer_branch
    %8 = sbr.rel target = $region3
  $region8: #{graph_attn_bias.1} parent=0 // loop_exit
    _

</llo_original>
